<compile_context>
chip_gen: v6e
topology: v6e:2x2x1
jax: 0.10.0
libtpu: 0.0.40
codegen_flags: <defaults>
</compile_context>

<pallas_src>
import functools

import jax
import jax.numpy as jnp
from jax.experimental import pallas as pl
from jax.experimental.pallas import tpu as pltpu

H1_DIM = 80       # hidden width of the reference module
H1_PAD = 128      # lane-aligned hidden width
_TB_MIN = 512     # don't split the batch below this (per-step overhead dominates)
_TB_MAX = 4096    # per-step row cap (VMEM comfort with 128-lane hidden/output tiles)


def _round_up(x: int, m: int) -> int:
    return ((x + m - 1) // m) * m


def _cdiv(a: int, b: int) -> int:
    return -(-a // b)


def _choose_batch_tile(B: int) -> int:
    """Batch-tile rows: one big step for small B, else an even number of steps
    (balanced across v7x's two TensorCores), each <= _TB_MAX rows."""
    if B < 2 * _TB_MIN:
        return _round_up(max(B, 8), 8)
    n_steps = max(2, _cdiv(B, _TB_MAX))
    n_steps = _round_up(n_steps, 2)          # even -> 50/50 split on v7x megacore
    return _round_up(_cdiv(B, n_steps), 8)


def qnet_kernel(x_ref, w1_ref, b1_ref, w2_ref, b2_ref, o_ref):
    # Layer 1: MXU matmul (f32 accumulate), VPU bias-add + ReLU.
    x = x_ref[...]                                               # (TB, S)
    h1 = jnp.dot(x, w1_ref[...], preferred_element_type=jnp.float32)
    h1 = jnp.maximum(h1 + b1_ref[...], 0.0)                      # (TB, H1_PAD)
    # Layer 2: MXU matmul, bias-add, lane-dense (128-wide) unmasked store.
    out = jnp.dot(h1, w2_ref[...], preferred_element_type=jnp.float32)
    o_ref[...] = out + b2_ref[...]                               # (TB, A_pad)


def _qnet_padded(states, w1_p, b1_p, w2_p, b2_p):
    """Fused forward; returns the lane-padded (B, A_pad) output buffer."""
    B, S = states.shape
    A_pad = w2_p.shape[1]

    TB = _choose_batch_tile(B)
    grid = (_cdiv(B, TB),)

    in_specs = [
        pl.BlockSpec((TB, S), lambda i: (i, 0)),          # x tile (batch-tiled)
        pl.BlockSpec((S, H1_PAD), lambda i: (0, 0)),      # w1 (resident in VMEM)
        pl.BlockSpec((1, H1_PAD), lambda i: (0, 0)),      # b1 (resident)
        pl.BlockSpec((H1_PAD, A_pad), lambda i: (0, 0)),  # w2 (resident)
        pl.BlockSpec((1, A_pad), lambda i: (0, 0)),       # b2 (resident)
    ]
    out_specs = pl.BlockSpec((TB, A_pad), lambda i: (i, 0))

    flops = 2 * B * (S * H1_PAD + H1_PAD * A_pad)
    bytes_accessed = 4 * (
        B * S + B * A_pad + S * H1_PAD + H1_PAD + H1_PAD * A_pad + A_pad
    )

    return pl.pallas_call(
        qnet_kernel,
        out_shape=jax.ShapeDtypeStruct((B, A_pad), jnp.float32),
        grid=grid,
        in_specs=in_specs,
        out_specs=out_specs,
        compiler_params=pltpu.CompilerParams(
            dimension_semantics=("parallel",),
        ),
        cost_estimate=pl.CostEstimate(
            flops=flops, transcendentals=0, bytes_accessed=bytes_accessed
        ),
    )(states, w1_p, b1_p, w2_p, b2_p)


@functools.partial(jax.jit, static_argnames=("num_actions",))
def qnetwork_forward(states, w1_p, b1_p, w2_p, b2_p, *, num_actions):
    """Forward pass with the module's exact semantics: returns [B, num_actions].

    states: [B, num_states] f32
    w1_p:   [num_states, 128] f32  (pre-padded, from pad_params)
    b1_p:   [1, 128] f32
    w2_p:   [128, A_pad] f32
    b2_p:   [1, A_pad] f32
    """
    out_pad = _qnet_padded(states, w1_p, b1_p, w2_p, b2_p)
    return out_pad[:, :num_actions]


# For consumers that can take the padded (B, 128) buffer (e.g. fused argmax /
# action-gather downstream), skip the slice entirely.
qnetwork_forward_padded = jax.jit(_qnet_padded)


def init_params(key, num_states, num_actions, h1dim=H1_DIM):
    """Deterministic init mimicking torch.nn.Linear (uniform +-1/sqrt(fan_in)).
    Weights stored as [in, out] (transposed vs torch's [out, in])."""
    k1, k2, k3, k4 = jax.random.split(key, 4)
    lim1 = 1.0 / jnp.sqrt(jnp.float32(num_states))
    lim2 = 1.0 / jnp.sqrt(jnp.float32(h1dim))
    w1 = jax.random.uniform(k1, (num_states, h1dim), jnp.float32, -lim1, lim1)
    b1 = jax.random.uniform(k2, (h1dim,), jnp.float32, -lim1, lim1)
    w2 = jax.random.uniform(k3, (h1dim, num_actions), jnp.float32, -lim2, lim2)
    b2 = jax.random.uniform(k4, (num_actions,), jnp.float32, -lim2, lim2)
    return w1, b1, w2, b2


def pad_params(w1, b1, w2, b2):
    """One-time lane-alignment of the parameters (zero padding == exact math).
    Do this ONCE at init / after each optimizer step, outside the hot path."""
    S, H = w1.shape
    A = w2.shape[1]
    assert H == H1_DIM
    A_pad = _round_up(max(A, 128), 128)
    w1_p = jnp.pad(w1, ((0, 0), (0, H1_PAD - H)))
    b1_p = jnp.pad(b1, (0, H1_PAD - H)).reshape(1, H1_PAD)
    w2_p = jnp.pad(w2, ((0, H1_PAD - H), (0, A_pad - A)))
    b2_p = jnp.pad(b2, (0, A_pad - A)).reshape(1, A_pad)
    return w1_p, b1_p, w2_p, b2_p


def _reference(states, w1, b1, w2, b2):
    return jnp.maximum(states @ w1 + b1[None, :], 0.0) @ w2 + b2[None, :]


if __name__ == "__main__":
    # Acrobot-v1: 6 state dims, 3 discrete actions.
    num_states, num_actions, batch = 6, 3, 8

    key = jax.random.PRNGKey(0)
    kx, kp = jax.random.split(key)
    states = jax.random.normal(kx, (batch, num_states), jnp.float32)
    w1, b1, w2, b2 = init_params(kp, num_states, num_actions)

    # Pad the parameters once, outside the per-call hot path.
    w1_p, b1_p, w2_p, b2_p = pad_params(w1, b1, w2, b2)
    w1_p, b1_p, w2_p, b2_p = jax.block_until_ready((w1_p, b1_p, w2_p, b2_p))

    # Small inference-style batch (single grid step).
    out = qnetwork_forward(states, w1_p, b1_p, w2_p, b2_p, num_actions=num_actions)
    out = jax.block_until_ready(out)
    ref = _reference(states, w1, b1, w2, b2)
    assert out.shape == (batch, num_actions)
    assert jnp.allclose(out, ref, atol=1e-5, rtol=1e-5)

    # Tiny non-multiple-of-8 batch (partial block, single step).
    tiny = states[:5]
    tiny_out = jax.block_until_ready(
        qnetwork_forward(tiny, w1_p, b1_p, w2_p, b2_p, num_actions=num_actions)
    )
    assert tiny_out.shape == (5, num_actions)
    assert jnp.allclose(tiny_out, _reference(tiny, w1, b1, w2, b2), atol=1e-5, rtol=1e-5)

    # Training-style batch: exercises the multi-step (even) grid + partial last block.
    big_b = 1061
    big_states = jax.random.normal(kx, (big_b, num_states), jnp.float32)
    big_out = jax.block_until_ready(
        qnetwork_forward(big_states, w1_p, b1_p, w2_p, b2_p, num_actions=num_actions)
    )
    assert big_out.shape == (big_b, num_actions)
    assert jnp.allclose(
        big_out, _reference(big_states, w1, b1, w2, b2), atol=1e-4, rtol=1e-4
    )

    # Padded-output variant (consumer accepts (B, 128); no slice op).
    pad_out = jax.block_until_ready(
        qnetwork_forward_padded(states, w1_p, b1_p, w2_p, b2_p)
    )
    assert pad_out.shape == (batch, 128)
    assert jnp.allclose(pad_out[:, :num_actions], ref, atol=1e-5, rtol=1e-5)

    print("KERNEL_OK")
</pallas_src>

<mosaic_0001>
module attributes {stable_mosaic.version = 11 : i64} {
  func.func @qnet_kernel(%arg0: i32, %arg1: memref<8x6xf32, #tpu.memory_space<vmem>>, %arg2: memref<6x128xf32, #tpu.memory_space<vmem>>, %arg3: memref<1x128xf32, #tpu.memory_space<vmem>>, %arg4: memref<128x128xf32, #tpu.memory_space<vmem>>, %arg5: memref<1x128xf32, #tpu.memory_space<vmem>>, %arg6: memref<8x128xf32, #tpu.memory_space<vmem>>) attributes {dimension_semantics = [#tpu.dimension_semantics<parallel>], iteration_bounds = array<i64: 1>, scalar_prefetch = 0 : i64, scratch_operands = 0 : i64, tpu.core_type = #tpu.core_type<tc>, window_params = [{transform_indices = @transform_0, window_bounds = array<i64: 8, 6>}, {pipeline_mode = #tpu.pipeline_mode<synchronous>, transform_indices = @transform_1, window_bounds = array<i64: 6, 128>}, {pipeline_mode = #tpu.pipeline_mode<synchronous>, transform_indices = @transform_2, window_bounds = array<i64: 1, 128>}, {pipeline_mode = #tpu.pipeline_mode<synchronous>, transform_indices = @transform_3, window_bounds = array<i64: 128, 128>}, {pipeline_mode = #tpu.pipeline_mode<synchronous>, transform_indices = @transform_4, window_bounds = array<i64: 1, 128>}, {transform_indices = @transform_5, window_bounds = array<i64: 8, 128>}]} {
    %c0 = arith.constant 0 : index
    %c0_0 = arith.constant 0 : index
    %0 = vector.load %arg1[%c0, %c0_0] : memref<8x6xf32, #tpu.memory_space<vmem>>, vector<8x6xf32>
    %c0_1 = arith.constant 0 : index
    %c0_2 = arith.constant 0 : index
    %1 = vector.load %arg2[%c0_1, %c0_2] : memref<6x128xf32, #tpu.memory_space<vmem>>, vector<6x128xf32>
    %cst = arith.constant dense<0.000000e+00> : vector<8x128xf32>
    %2 = tpu.matmul %0, %1, %cst {dimension_numbers = #tpu.dot_dimension_numbers<[1], [0], [0], [1], [0, 0, 1, 1], [], []>} : vector<8x6xf32>, vector<6x128xf32>, vector<8x128xf32> -> vector<8x128xf32>
    %c0_3 = arith.constant 0 : index
    %c0_4 = arith.constant 0 : index
    %3 = vector.load %arg3[%c0_3, %c0_4] : memref<1x128xf32, #tpu.memory_space<vmem>>, vector<1x128xf32>
    %4 = vector.broadcast %3 : vector<1x128xf32> to vector<8x128xf32>
    %5 = arith.addf %2, %4 : vector<8x128xf32>
    %cst_5 = arith.constant 0.000000e+00 : f32
    %6 = vector.broadcast %cst_5 : f32 to vector<8x128xf32>
    %7 = arith.maximumf %5, %6 : vector<8x128xf32>
    %c0_6 = arith.constant 0 : index
    %c0_7 = arith.constant 0 : index
    %8 = vector.load %arg4[%c0_6, %c0_7] : memref<128x128xf32, #tpu.memory_space<vmem>>, vector<128x128xf32>
    %cst_8 = arith.constant dense<0.000000e+00> : vector<8x128xf32>
    %9 = tpu.matmul %7, %8, %cst_8 {dimension_numbers = #tpu.dot_dimension_numbers<[1], [0], [0], [1], [0, 0, 1, 1], [], []>} : vector<8x128xf32>, vector<128x128xf32>, vector<8x128xf32> -> vector<8x128xf32>
    %c0_9 = arith.constant 0 : index
    %c0_10 = arith.constant 0 : index
    %10 = vector.load %arg5[%c0_9, %c0_10] : memref<1x128xf32, #tpu.memory_space<vmem>>, vector<1x128xf32>
    %11 = vector.broadcast %10 : vector<1x128xf32> to vector<8x128xf32>
    %12 = arith.addf %9, %11 : vector<8x128xf32>
    %c0_11 = arith.constant 0 : index
    %c0_12 = arith.constant 0 : index
    %13 = vector.load %arg6[%c0_11, %c0_12] : memref<8x128xf32, #tpu.memory_space<vmem>>, vector<8x128xf32>
    tpu.vector_store %arg6[%c0_11, %c0_12], %12 {strides = array<i32>} : memref<8x128xf32, #tpu.memory_space<vmem>>, vector<8x128xf32>,
    return
  }
  func.func @transform_0(%arg0: i32) -> (i32, i32) {
    %c0_i32 = arith.constant 0 : i32
    %c0_i32_0 = arith.constant 0 : i32
    return %arg0, %c0_i32 : i32, i32
  }
  func.func @transform_1(%arg0: i32) -> (i32, i32) {
    %c0_i32 = arith.constant 0 : i32
    %c0_i32_0 = arith.constant 0 : i32
    %c0_i32_1 = arith.constant 0 : i32
    return %c0_i32, %c0_i32_0 : i32, i32
  }
  func.func @transform_2(%arg0: i32) -> (i32, i32) {
    %c0_i32 = arith.constant 0 : i32
    %c0_i32_0 = arith.constant 0 : i32
    %c0_i32_1 = arith.constant 0 : i32
    return %c0_i32, %c0_i32_0 : i32, i32
  }
  func.func @transform_3(%arg0: i32) -> (i32, i32) {
    %c0_i32 = arith.constant 0 : i32
    %c0_i32_0 = arith.constant 0 : i32
    %c0_i32_1 = arith.constant 0 : i32
    return %c0_i32, %c0_i32_0 : i32, i32
  }
  func.func @transform_4(%arg0: i32) -> (i32, i32) {
    %c0_i32 = arith.constant 0 : i32
    %c0_i32_0 = arith.constant 0 : i32
    %c0_i32_1 = arith.constant 0 : i32
    return %c0_i32, %c0_i32_0 : i32, i32
  }
  func.func @transform_5(%arg0: i32) -> (i32, i32) {
    %c0_i32 = arith.constant 0 : i32
    %c0_i32_0 = arith.constant 0 : i32
    return %arg0, %c0_i32 : i32, i32
  }
}

</mosaic_0001>

<llo_original>
// kernel: qnetwork_forward.1
$region0: #{qnetwork_forward.1}
  #allocation0 [shape = 'u32[]', space=smem, size = 0x4, offset = 0x4, fixed_abs, tag = 'smem constant byte address 0x4 - core index']
  #allocation1 [shape = 'u32[144,128]{1,0:T(1,128)}', space=vmem, size = 0x12000, scoped, tag = 'internal scratch']
  %s0 = inlined_call_operand.hbm [shape: f32[8,6], index: 0, kind: input, shape index: {}]
  %s1 = inlined_call_operand.hbm [shape: f32[6,128], index: 1, kind: input, shape index: {}]
  %s2 = inlined_call_operand.vmem [shape: f32[1,128], index: 2, kind: input, shape index: {}]
  %s3 = inlined_call_operand.hbm [shape: f32[128,128], index: 3, kind: input, shape index: {}]
  %s4 = inlined_call_operand.vmem [shape: f32[1,128], index: 4, kind: input, shape index: {}]
  %s5 = inlined_call_operand.vmem [shape: f32[8,128], index: 5, kind: output, shape index: {}]
  %s6 = sld [smem:[#allocation0]]
  $region42: #{qnetwork_forward.1} parent=0
    _
  %s8 = ssub.s32 1, %s6
  %s9 = scalar_select 0, %s8, %s6
  $region1: #{qnetwork_forward.1} parent=0
    #allocation2 [shape = 'u8[4096]{0}', space=vmem, size = 0x1000, scoped, tag = 'input window, operand 0, single buffered']
    #allocation3 [shape = 's32[1]{0}', space=sflag, size = 0x4, scoped, tag = 'scoped memory for qnetwork_forward.1']
    #allocation4 [shape = 'u8[4096]{0}', space=vmem, size = 0x1000, scoped, tag = 'input window, operand 1, single buffered']
    #allocation5 [shape = 's32[1]{0}', space=sflag, size = 0x4, scoped, tag = 'scoped memory for qnetwork_forward.1']
    #allocation6 [shape = 'u8[65536]{0}', space=vmem, size = 0x10000, scoped, tag = 'input window, operand 3, single buffered']
    %10 = vsyncpa [#allocation3], 0
    %11 = vsyncpa [#allocation5], 0
    // Predicated region
    $region2: #{qnetwork_forward.1} parent=1 // pred_check
      _
    $region3: #{qnetwork_forward.1} parent=1 // pred_check_branch
      %13 = sbr.rel (0) target = $region5
    $region4: #{qnetwork_forward.1} parent=1 // pred_region
      %s15 = ssub.s32 128, 128
      %16 = vsyncadd [#allocation3], %s15
      %s18 = sshll.u32 [#allocation2], 4
      %s19 = int_to_ptr.vmem [resolvable:$true] %s18
      %21 = dma.hbm_to_vmem [thread:$0]  %s0, 128, %s19, [#allocation3]
    $region5: #{qnetwork_forward.1} parent=1 // pred_fallthru
      _
    // Predicated region
    $region6: #{qnetwork_forward.1} parent=1 // pred_check
      _
    $region7: #{qnetwork_forward.1} parent=1 // pred_check_branch
      %23 = sbr.rel (0) target = $region9
    $region8: #{qnetwork_forward.1} parent=1 // pred_region
      %s25 = ssub.s32 128, 128
      %26 = vsyncadd [#allocation5], %s25
      %s28 = sshll.u32 [#allocation4], 4
      %s29 = int_to_ptr.vmem [resolvable:$true] %s28
      %31 = dma.hbm_to_vmem [thread:$0]  %s1, 128, %s29, [#allocation5]
    $region9: #{qnetwork_forward.1} parent=1 // pred_fallthru
      _
    // Predicated region
    $region10: #{qnetwork_forward.1} parent=1 // pred_check
      _
    $region11: #{qnetwork_forward.1} parent=1 // pred_check_branch
      %33 = sbr.rel (0) target = $region13
    $region12: #{qnetwork_forward.1} parent=1 // pred_region
      _
    $region13: #{qnetwork_forward.1} parent=1 // pred_fallthru
      _
    // Predicated region
    $region14: #{qnetwork_forward.1} parent=1 // pred_check
      _
    $region15: #{qnetwork_forward.1} parent=1 // pred_check_branch
      %35 = sbr.rel (0) target = $region17
    $region16: #{qnetwork_forward.1} parent=1 // pred_region
      %s37 = ssub.s32 2048, 2048
      %38 = vsyncadd [#allocation5], %s37
      %s39 = sshll.u32 [#allocation6], 4
      %s40 = int_to_ptr.vmem [resolvable:$true] %s39
      %45 = dma.hbm_to_vmem [thread:$0]  %s3, 2048, %s40, [#allocation5], 128, 128, 8
    $region17: #{qnetwork_forward.1} parent=1 // pred_fallthru
      _
    // Predicated region
    $region18: #{qnetwork_forward.1} parent=1 // pred_check
      _
    $region19: #{qnetwork_forward.1} parent=1 // pred_check_branch
      %47 = sbr.rel (0) target = $region21
    $region20: #{qnetwork_forward.1} parent=1 // pred_region
      _
    $region21: #{qnetwork_forward.1} parent=1 // pred_fallthru
      _
    // Predicated region
    $region22: #{qnetwork_forward.1} parent=1 // pred_check
      _
    $region23: #{qnetwork_forward.1} parent=1 // pred_check_branch
      %49 = sbr.rel (0) target = $region25
    $region24: #{qnetwork_forward.1} parent=1 // pred_region
      %50 = dma.done [#allocation3], 128
    $region25: #{qnetwork_forward.1} parent=1 // pred_fallthru
      _
    // Predicated region
    $region26: #{qnetwork_forward.1} parent=1 // pred_check
      _
    $region27: #{qnetwork_forward.1} parent=1 // pred_check_branch
      %52 = sbr.rel (0) target = $region29
    $region28: #{qnetwork_forward.1} parent=1 // pred_region
      %53 = dma.done [#allocation5], 128
    $region29: #{qnetwork_forward.1} parent=1 // pred_fallthru
      _
    // Predicated region
    $region30: #{qnetwork_forward.1} parent=1 // pred_check
      _
    $region31: #{qnetwork_forward.1} parent=1 // pred_check_branch
      %55 = sbr.rel (0) target = $region33
    $region32: #{qnetwork_forward.1} parent=1 // pred_region
      %56 = dma.done [#allocation5], 2048
    $region33: #{qnetwork_forward.1} parent=1 // pred_fallthru
      _
    %v57 = vld [vmem:[#allocation2] sm:$0xff]
    %v58 = vld [vmem:[#allocation4] sm:$0x3f]
    %v59 = vld [vmem:[%s2] sm:$0x1]
    %v61 = vlaneseq
    %v62 = vshrl.u32 %v61, 7
    %v63 = vsub.s32 0, %v62
    %v64 = vrot.slane %v59, %v63
    %vm66 = vcmask 48128
    %v68 = vsel %vm66, %v57, 0
    %vm70 = vcmask 1045504
    %v72 = vsel %vm70, %v58, 0
    %74 = vmatprep.subr.mxu0 0.0
    %75 = vmatpush1.msra.mxu0 0.0
    %76 = vmatprep.subr.mxu0 0.0
    %77 = vmatpush1.msra.mxu0 0.0
    %78 = vmatprep.subr.mxu0 0.0
    %79 = vmatpush1.msra.mxu0 0.0
    %80 = vmatprep.subr.mxu0 0.0
    %81 = vmatpush1.msra.mxu0 0.0
    %82 = vmatprep.subr.mxu0 0.0
    %83 = vmatpush1.msra.mxu0 0.0
    %84 = vmatprep.subr.mxu0 0.0
    %85 = vmatpush1.msra.mxu0 0.0
    %86 = vmatprep.subr.mxu0 0.0
    %87 = vmatpush1.msra.mxu0 0.0
    %88 = vmatprep.subr.mxu0 0.0
    %89 = vmatpush1.msra.mxu0 0.0
    %90 = vmatprep.subr.mxu0 0.0
    %91 = vmatpush1.msra.mxu0 0.0
    %92 = vmatprep.subr.mxu0 0.0
    %93 = vmatpush1.msra.mxu0 0.0
    %94 = vmatprep.subr.mxu0 0.0
    %95 = vmatpush1.msra.mxu0 0.0
    %96 = vmatprep.subr.mxu0 0.0
    %97 = vmatpush1.msra.mxu0 0.0
    %98 = vmatprep.subr.mxu0 0.0
    %99 = vmatpush1.msra.mxu0 0.0
    %100 = vmatprep.subr.mxu0 0.0
    %101 = vmatpush1.msra.mxu0 0.0
    %102 = vmatprep.subr.mxu0 0.0
    %103 = vmatpush1.msra.mxu0 0.0
    %104 = vmatprep.subr.mxu0 0.0
    %105 = vmatpush1.msra.mxu0 %v72
    %106 = vmatprep.subr.mxu0 0.0
    %107 = vmatpush2.msra.mxu0 0.0
    %108 = vmatprep.subr.mxu0 0.0
    %109 = vmatpush2.msra.mxu0 0.0
    %110 = vmatprep.subr.mxu0 0.0
    %111 = vmatpush2.msra.mxu0 0.0
    %112 = vmatprep.subr.mxu0 0.0
    %113 = vmatpush2.msra.mxu0 0.0
    %114 = vmatprep.subr.mxu0 0.0
    %115 = vmatpush2.msra.mxu0 0.0
    %116 = vmatprep.subr.mxu0 0.0
    %117 = vmatpush2.msra.mxu0 0.0
    %118 = vmatprep.subr.mxu0 0.0
    %119 = vmatpush2.msra.mxu0 0.0
    %120 = vmatprep.subr.mxu0 0.0
    %121 = vmatpush2.msra.mxu0 0.0
    %122 = vmatprep.subr.mxu0 0.0
    %123 = vmatpush2.msra.mxu0 0.0
    %124 = vmatprep.subr.mxu0 0.0
    %125 = vmatpush2.msra.mxu0 0.0
    %126 = vmatprep.subr.mxu0 0.0
    %127 = vmatpush2.msra.mxu0 0.0
    %128 = vmatprep.subr.mxu0 0.0
    %129 = vmatpush2.msra.mxu0 0.0
    %130 = vmatprep.subr.mxu0 0.0
    %131 = vmatpush2.msra.mxu0 0.0
    %132 = vmatprep.subr.mxu0 0.0
    %133 = vmatpush2.msra.mxu0 0.0
    %134 = vmatprep.subr.mxu0 0.0
    %135 = vmatpush2.msra.mxu0 0.0
    %136 = vmatprep.subr.mxu0 0.0
    %137 = vmatpush2.msra.mxu0 0.0
    %138 = vmatprep.mubr.f32.mxu0 0.0
    %139 = vmatmul.mubr.f32.gmra.mxu0 %v68
    %v140 = vpop.f32.mrf.mxu0
    %v141 = vadd.f32 %v64, %v140
    %v142 = vpop.f32.mrf.mxu0
    %143 = vdwg.mxu0
    %v144 = vmax.f32 %v141, 0.0
    %v145 = vld [vmem:[#allocation6] sm:$0xff]
    %v146 = vld [vmem:[#allocation6 + $0x8] sm:$0xff]
    %v147 = vld [vmem:[#allocation6 + $0x10] sm:$0xff]
    %v148 = vld [vmem:[#allocation6 + $0x18] sm:$0xff]
    %v149 = vld [vmem:[#allocation6 + $0x20] sm:$0xff]
    %v150 = vld [vmem:[#allocation6 + $0x28] sm:$0xff]
    %v151 = vld [vmem:[#allocation6 + $0x30] sm:$0xff]
    %v152 = vld [vmem:[#allocation6 + $0x38] sm:$0xff]
    %v153 = vld [vmem:[#allocation6 + $0x40] sm:$0xff]
    %v154 = vld [vmem:[#allocation6 + $0x48] sm:$0xff]
    %v155 = vld [vmem:[#allocation6 + $0x50] sm:$0xff]
    %v156 = vld [vmem:[#allocation6 + $0x58] sm:$0xff]
    %v157 = vld [vmem:[#allocation6 + $0x60] sm:$0xff]
    %v158 = vld [vmem:[#allocation6 + $0x68] sm:$0xff]
    %v159 = vld [vmem:[#allocation6 + $0x70] sm:$0xff]
    %v160 = vld [vmem:[#allocation6 + $0x78] sm:$0xff]
    %v161 = vld [vmem:[%s4] sm:$0x1]
    %v163 = vlaneseq
    %v164 = vshrl.u32 %v163, 7
    %v165 = vsub.s32 0, %v164
    %v166 = vrot.slane %v161, %v165
    %168 = vmatprep.subr.mxu0 0.0
    %169 = vmatpush1.msra.mxu0 %v160
    %170 = vmatprep.subr.mxu0 0.0
    %171 = vmatpush1.msra.mxu0 %v159
    %172 = vmatprep.subr.mxu0 0.0
    %173 = vmatpush1.msra.mxu0 %v158
    %174 = vmatprep.subr.mxu0 0.0
    %175 = vmatpush1.msra.mxu0 %v157
    %176 = vmatprep.subr.mxu0 0.0
    %177 = vmatpush1.msra.mxu0 %v156
    %178 = vmatprep.subr.mxu0 0.0
    %179 = vmatpush1.msra.mxu0 %v155
    %180 = vmatprep.subr.mxu0 0.0
    %181 = vmatpush1.msra.mxu0 %v154
    %182 = vmatprep.subr.mxu0 0.0
    %183 = vmatpush1.msra.mxu0 %v153
    %184 = vmatprep.subr.mxu0 0.0
    %185 = vmatpush1.msra.mxu0 %v152
    %186 = vmatprep.subr.mxu0 0.0
    %187 = vmatpush1.msra.mxu0 %v151
    %188 = vmatprep.subr.mxu0 0.0
    %189 = vmatpush1.msra.mxu0 %v150
    %190 = vmatprep.subr.mxu0 0.0
    %191 = vmatpush1.msra.mxu0 %v149
    %192 = vmatprep.subr.mxu0 0.0
    %193 = vmatpush1.msra.mxu0 %v148
    %194 = vmatprep.subr.mxu0 0.0
    %195 = vmatpush1.msra.mxu0 %v147
    %196 = vmatprep.subr.mxu0 0.0
    %197 = vmatpush1.msra.mxu0 %v146
    %198 = vmatprep.subr.mxu0 0.0
    %199 = vmatpush1.msra.mxu0 %v145
    %200 = vmatprep.subr.mxu0 0.0
    %201 = vmatpush2.msra.mxu0 0.0
    %202 = vmatprep.subr.mxu0 0.0
    %203 = vmatpush2.msra.mxu0 0.0
    %204 = vmatprep.subr.mxu0 0.0
    %205 = vmatpush2.msra.mxu0 0.0
    %206 = vmatprep.subr.mxu0 0.0
    %207 = vmatpush2.msra.mxu0 0.0
    %208 = vmatprep.subr.mxu0 0.0
    %209 = vmatpush2.msra.mxu0 0.0
    %210 = vmatprep.subr.mxu0 0.0
    %211 = vmatpush2.msra.mxu0 0.0
    %212 = vmatprep.subr.mxu0 0.0
    %213 = vmatpush2.msra.mxu0 0.0
    %214 = vmatprep.subr.mxu0 0.0
    %215 = vmatpush2.msra.mxu0 0.0
    %216 = vmatprep.subr.mxu0 0.0
    %217 = vmatpush2.msra.mxu0 0.0
    %218 = vmatprep.subr.mxu0 0.0
    %219 = vmatpush2.msra.mxu0 0.0
    %220 = vmatprep.subr.mxu0 0.0
    %221 = vmatpush2.msra.mxu0 0.0
    %222 = vmatprep.subr.mxu0 0.0
    %223 = vmatpush2.msra.mxu0 0.0
    %224 = vmatprep.subr.mxu0 0.0
    %225 = vmatpush2.msra.mxu0 0.0
    %226 = vmatprep.subr.mxu0 0.0
    %227 = vmatpush2.msra.mxu0 0.0
    %228 = vmatprep.subr.mxu0 0.0
    %229 = vmatpush2.msra.mxu0 0.0
    %230 = vmatprep.subr.mxu0 0.0
    %231 = vmatpush2.msra.mxu0 0.0
    %232 = vmatprep.mubr.f32.mxu0 0.0
    %233 = vmatmul.mubr.f32.gmra.mxu0 %v144
    %v234 = vpop.f32.mrf.mxu0
    %v235 = vadd.f32 %v166, %v234
    %v236 = vpop.f32.mrf.mxu0
    %237 = vdwg.mxu0
    %238 = vst [vmem:[%s5] sm:$0xff] %v235
    // Predicated region
    $region34: #{qnetwork_forward.1} parent=1 // pred_check
      _
    $region35: #{qnetwork_forward.1} parent=1 // pred_check_branch
      %240 = sbr.rel (0) target = $region37
    $region36: #{qnetwork_forward.1} parent=1 // pred_region
      _
    $region37: #{qnetwork_forward.1} parent=1 // pred_fallthru
      _
    // Predicated region
    $region38: #{qnetwork_forward.1} parent=1 // pred_check
      _
    $region39: #{qnetwork_forward.1} parent=1 // pred_check_branch
      %242 = sbr.rel (0) target = $region41
    $region40: #{qnetwork_forward.1} parent=1 // pred_region
      _
    $region41: #{qnetwork_forward.1} parent=1 // pred_fallthru
      _
    %243 = vsyncpa [#allocation3], 1
    %244 = vsyncpa [#allocation5], 1

</llo_original>
